<compile_context>
chip_gen: v6e
topology: v6e:2x2x1
jax: 0.10.0
libtpu: 0.0.40
codegen_flags: <defaults>
</compile_context>

<pallas_src>
import math

import jax
import jax.numpy as jnp
from jax.experimental import pallas as pl
from jax.experimental.pallas import tpu as pltpu


def _gelu(x):
    # GPT-2 style tanh-approx gelu, matching `gelu` used in pcll/mycvae/model.py.
    return 0.5 * x * (1.0 + jnp.tanh(
        math.sqrt(2.0 / math.pi) * (x + 0.044715 * x ** 3)))


def _attn_math(x, w, m):
    """x: (TB, S, H), w: (1, H), m: (TB, S) or None. Returns (rep, probs) in f32."""
    xf = x.astype(jnp.float32)                             # (TB, S, H)
    wf = w.astype(jnp.float32)[:, None, :]                 # (1, 1, H)

    # raw scores: dot with the attention vector (VPU mul + lane reduce over H).
    # TODO(synk): on v7x, if bundle dumps show VALU/XLU saturation, move this and
    # the `rep` contraction onto the (idle) MXU via batched dot_general.
    raw = jnp.sum(xf * wf, axis=-1)                        # (TB, S)
    s = _gelu(raw)
    if m is not None:
        s = s + m.astype(jnp.float32)

    # numerically-stable softmax over the sequence (lane) axis
    s = s - jnp.max(s, axis=-1, keepdims=True)
    e = jnp.exp(s)
    denom = jnp.sum(e, axis=-1, keepdims=True)             # (TB, 1)
    inv = pl.reciprocal(denom, approx=True)                # EUP vrcp
    inv = inv * (2.0 - denom * inv)                        # one Newton step -> ~f32 exact
    p = e * inv                                            # (TB, S)

    # weighted sum over the sequence axis -> representation
    rep = jnp.sum(xf * p[:, :, None], axis=1)              # (TB, H)
    return rep, p


def _kernel_nomask(x_ref, w_ref, rep_ref, sc_ref):
    rep, p = _attn_math(x_ref[...], w_ref[...], None)
    rep_ref[...] = rep.astype(rep_ref.dtype)
    sc_ref[...] = p.astype(sc_ref.dtype)


def _kernel_mask(x_ref, w_ref, m_ref, rep_ref, sc_ref):
    rep, p = _attn_math(x_ref[...], w_ref[...], m_ref[...])
    rep_ref[...] = rep.astype(rep_ref.dtype)
    sc_ref[...] = p.astype(sc_ref.dtype)


def _jax_fallback(inputs, w, attention_mask=None):
    scores = _gelu(jnp.einsum("bsh,h->bs", inputs, w.astype(inputs.dtype)))
    if attention_mask is not None:
        scores = scores + attention_mask.astype(scores.dtype)
    scores = jax.nn.softmax(scores, axis=-1)
    rep = jnp.sum(inputs * scores[..., None], axis=1)
    return rep, scores


def _vmem_limit_bytes():
    """3/4 of physical VMEM: 96 MiB on v5e/v6e (128 MiB), 48 MiB on v7x (64 MiB)."""
    cap = 64 * 1024 * 1024                      # conservative default if query fails
    try:
        cap = int(pltpu.get_tpu_info().vmem_capacity_bytes)
    except Exception:
        pass
    return min(cap * 3 // 4, 96 * 1024 * 1024)


def average_self_attention(inputs, attention_weights, attention_mask=None,
                           *, force_pallas=False, min_pallas_bytes=1 << 20):
    """Pallas implementation of AverageSelfAttention.forward for (B, S, H) inputs.

    inputs:            (B, S, H)
    attention_weights: (H,)
    attention_mask:    (B, S) or None (added to scores pre-softmax)
    returns: (representations (B, H), scores (B, S))
    """
    # TODO(synk): 2-D input path (len(shape)==2 -> sum over dim 0) not needed for
    # the batched use-case; only the 3-D (B, S, H) path is implemented.
    B, S, H = inputs.shape
    dtype = inputs.dtype
    itemsize = jnp.dtype(dtype).itemsize

    nbytes = inputs.size * itemsize
    if not force_pallas and nbytes < min_pallas_bytes:
        # Custom-call / grid overhead beats the data movement at tiny sizes.
        return _jax_fallback(inputs, attention_weights, attention_mask)

    vmem_limit = _vmem_limit_bytes()

    # --- tile selection: TB batch rows per grid step --------------------------
    # Per batch row: double-buffered input block (native dtype) plus ~3
    # block-sized f32 temporaries inside the kernel (f32 cast, x*w product,
    # x*p product).  Outputs / mask / scalars live in the 4 MiB headroom.
    row_budget = 2 * S * H * itemsize + 3 * S * H * 4
    usable = vmem_limit - (4 << 20)
    tb_budget = max(0, usable) // row_budget

    min_tb = B if B < 8 else 8
    if tb_budget < min_tb:
        # Even the smallest sublane-aligned batch tile would overflow VMEM.
        # TODO(synk): add sequence (S) tiling for very large S*H rows.
        return _jax_fallback(inputs, attention_weights, attention_mask)

    tb = int(tb_budget)
    if B >= 16:
        # Keep the grid at >= 2 (ideally >= 4) steps: restores double-buffered
        # DMA/compute overlap, and on v7x lets the "parallel" axis shard across
        # both TensorCores with >= 2 pipelined steps per core.
        tb = min(tb, max(8, (B // 4) // 8 * 8))
    if tb >= B:
        tb = B                                  # single block covers the full batch
    else:
        tb = max(8, (tb // 8) * 8)              # sublane-aligned batch tile
    grid = (pl.cdiv(B, tb),)                    # ragged tail handled by Pallas

    w2 = attention_weights.reshape(1, H)        # native dtype; upcast in-kernel

    x_spec = pl.BlockSpec((tb, S, H), lambda b: (b, 0, 0))
    w_spec = pl.BlockSpec((1, H), lambda b: (0, 0))
    out_shape = (jax.ShapeDtypeStruct((B, H), dtype),
                 jax.ShapeDtypeStruct((B, S), dtype))
    out_specs = (pl.BlockSpec((tb, H), lambda b: (b, 0)),
                 pl.BlockSpec((tb, S), lambda b: (b, 0)))
    cparams = pltpu.CompilerParams(
        dimension_semantics=("parallel",),
        vmem_limit_bytes=vmem_limit,
    )

    if attention_mask is None:
        rep, sc = pl.pallas_call(
            _kernel_nomask,
            out_shape=out_shape,
            grid_spec=pltpu.PrefetchScalarGridSpec(
                num_scalar_prefetch=0,
                grid=grid,
                in_specs=[x_spec, w_spec],
                out_specs=out_specs),
            compiler_params=cparams,
        )(inputs, w2)
    else:
        m_spec = pl.BlockSpec((tb, S), lambda b: (b, 0))
        rep, sc = pl.pallas_call(
            _kernel_mask,
            out_shape=out_shape,
            grid_spec=pltpu.PrefetchScalarGridSpec(
                num_scalar_prefetch=0,
                grid=grid,
                in_specs=[x_spec, w_spec, m_spec],
                out_specs=out_specs),
            compiler_params=cparams,
        )(inputs, w2, attention_mask)

    return rep, sc


def _reference(inputs, w, attention_mask=None):
    return _jax_fallback(inputs, w, attention_mask)


def _check(got, ref, name):
    g_rep, g_sc = got
    r_rep, r_sc = ref
    assert jnp.allclose(g_rep, r_rep, atol=2e-5, rtol=2e-5), f"{name}: rep mismatch"
    assert jnp.allclose(g_sc, r_sc, atol=2e-5, rtol=2e-5), f"{name}: scores mismatch"


if __name__ == "__main__":
    key = jax.random.PRNGKey(0)
    k_x, k_w, k_m, k_x2, k_w2, k_m2 = jax.random.split(key, 6)

    # ---- small smoke test (forced through the Pallas kernel) ----
    B, S, H = 2, 8, 32
    x = jax.random.normal(k_x, (B, S, H), dtype=jnp.float32)
    w = 0.02 * jax.random.normal(k_w, (H,), dtype=jnp.float32)   # nn.init.normal_(std=0.02)
    mask = jax.random.normal(k_m, (B, S), dtype=jnp.float32)

    out = average_self_attention(x, w, force_pallas=True)
    jax.block_until_ready(out)
    _check(out, _reference(x, w), "small/no-mask")

    out_m = average_self_attention(x, w, mask, force_pallas=True)
    jax.block_until_ready(out_m)
    _check(out_m, _reference(x, w, mask), "small/mask")

    # auto-dispatch path (tiny -> pure JAX fallback)
    out_f = average_self_attention(x, w, mask)
    jax.block_until_ready(out_f)
    _check(out_f, _reference(x, w, mask), "small/fallback")

    # ---- medium test: ragged batch tail (20 = 2*8 + 4), multi-step pipelined grid ----
    B2, S2, H2 = 20, 128, 256
    x2 = jax.random.normal(k_x2, (B2, S2, H2), dtype=jnp.float32)
    w2 = 0.02 * jax.random.normal(k_w2, (H2,), dtype=jnp.float32)
    mask2 = jax.random.normal(k_m2, (B2, S2), dtype=jnp.float32)

    out2 = average_self_attention(x2, w2, mask2, force_pallas=True)
    jax.block_until_ready(out2)
    _check(out2, _reference(x2, w2, mask2), "medium/mask")

    out2n = average_self_attention(x2, w2, force_pallas=True)
    jax.block_until_ready(out2n)
    _check(out2n, _reference(x2, w2), "medium/no-mask")

    print("KERNEL_OK")
</pallas_src>

<mosaic_0001>
module attributes {stable_mosaic.version = 11 : i64} {
  func.func @_kernel_nomask(%arg0: i32, %arg1: memref<2x8x32xf32, #tpu.memory_space<vmem>>, %arg2: memref<1x32xf32, #tpu.memory_space<vmem>>, %arg3: memref<2x32xf32, #tpu.memory_space<vmem>>, %arg4: memref<2x8xf32, #tpu.memory_space<vmem>>) attributes {dimension_semantics = [#tpu.dimension_semantics<parallel>], iteration_bounds = array<i64: 1>, scalar_prefetch = 0 : i64, scratch_operands = 0 : i64, tpu.core_type = #tpu.core_type<tc>, window_params = [{transform_indices = @transform_0, window_bounds = array<i64: 2, 8, 32>}, {pipeline_mode = #tpu.pipeline_mode<synchronous>, transform_indices = @transform_1, window_bounds = array<i64: 1, 32>}, {transform_indices = @transform_2, window_bounds = array<i64: 2, 32>}, {transform_indices = @transform_3, window_bounds = array<i64: 2, 8>}]} {
    %c0 = arith.constant 0 : index
    %c0_0 = arith.constant 0 : index
    %c0_1 = arith.constant 0 : index
    %0 = vector.load %arg1[%c0, %c0_0, %c0_1] : memref<2x8x32xf32, #tpu.memory_space<vmem>>, vector<2x8x32xf32>
    %c0_2 = arith.constant 0 : index
    %c0_3 = arith.constant 0 : index
    %1 = vector.load %arg2[%c0_2, %c0_3] : memref<1x32xf32, #tpu.memory_space<vmem>>, vector<1x32xf32>
    %2 = vector.shape_cast %1 : vector<1x32xf32> to vector<1x1x32xf32>
    %3 = vector.broadcast %2 : vector<1x1x32xf32> to vector<2x8x32xf32>
    %4 = arith.mulf %0, %3 : vector<2x8x32xf32>
    %cst = arith.constant dense<0.000000e+00> : vector<2x8xf32>
    %5 = vector.multi_reduction <add>, %4, %cst [2] : vector<2x8x32xf32> to vector<2x8xf32>
    %cst_4 = arith.constant 5.000000e-01 : f32
    %6 = vector.broadcast %cst_4 : f32 to vector<2x8xf32>
    %7 = arith.mulf %6, %5 : vector<2x8xf32>
    %8 = arith.mulf %5, %5 : vector<2x8xf32>
    %9 = arith.mulf %5, %8 : vector<2x8xf32>
    %cst_5 = arith.constant 4.471500e-02 : f32
    %10 = vector.broadcast %cst_5 : f32 to vector<2x8xf32>
    %11 = arith.mulf %10, %9 : vector<2x8xf32>
    %12 = arith.addf %5, %11 : vector<2x8xf32>
    %cst_6 = arith.constant 0.797884583 : f32
    %13 = vector.broadcast %cst_6 : f32 to vector<2x8xf32>
    %14 = arith.mulf %13, %12 : vector<2x8xf32>
    %15 = math.tanh %14 : vector<2x8xf32>
    %cst_7 = arith.constant 1.000000e+00 : f32
    %16 = vector.broadcast %cst_7 : f32 to vector<2x8xf32>
    %17 = arith.addf %16, %15 : vector<2x8xf32>
    %18 = arith.mulf %7, %17 : vector<2x8xf32>
    %cst_8 = arith.constant dense<0xFF800000> : vector<2xf32>
    %19 = vector.multi_reduction <maximumf>, %18, %cst_8 [1] : vector<2x8xf32> to vector<2xf32>
    %20 = vector.shape_cast %19 : vector<2xf32> to vector<2x1xf32>
    %21 = vector.broadcast %20 : vector<2x1xf32> to vector<2x8xf32>
    %22 = arith.subf %18, %21 : vector<2x8xf32>
    %23 = math.exp %22 : vector<2x8xf32>
    %cst_9 = arith.constant dense<0.000000e+00> : vector<2xf32>
    %24 = vector.multi_reduction <add>, %23, %cst_9 [1] : vector<2x8xf32> to vector<2xf32>
    %25 = vector.shape_cast %24 : vector<2xf32> to vector<2x1xf32>
    %26 = tpu.reciprocal %25 {approx = true} : vector<2x1xf32> -> vector<2x1xf32>
    %27 = arith.mulf %25, %26 : vector<2x1xf32>
    %cst_10 = arith.constant 2.000000e+00 : f32
    %28 = vector.broadcast %cst_10 : f32 to vector<2x1xf32>
    %29 = arith.subf %28, %27 : vector<2x1xf32>
    %30 = arith.mulf %26, %29 : vector<2x1xf32>
    %31 = vector.broadcast %30 : vector<2x1xf32> to vector<2x8xf32>
    %32 = arith.mulf %23, %31 : vector<2x8xf32>
    %33 = vector.shape_cast %32 : vector<2x8xf32> to vector<2x8x1xf32>
    %34 = vector.broadcast %33 : vector<2x8x1xf32> to vector<2x8x32xf32>
    %35 = arith.mulf %0, %34 : vector<2x8x32xf32>
    %cst_11 = arith.constant dense<0.000000e+00> : vector<2x32xf32>
    %36 = vector.multi_reduction <add>, %35, %cst_11 [1] : vector<2x8x32xf32> to vector<2x32xf32>
    %c0_12 = arith.constant 0 : index
    %c0_13 = arith.constant 0 : index
    %37 = vector.load %arg3[%c0_12, %c0_13] : memref<2x32xf32, #tpu.memory_space<vmem>>, vector<2x32xf32>
    tpu.vector_store %arg3[%c0_12, %c0_13], %36 {strides = array<i32>} : memref<2x32xf32, #tpu.memory_space<vmem>>, vector<2x32xf32>,
    %c0_14 = arith.constant 0 : index
    %c0_15 = arith.constant 0 : index
    %38 = vector.load %arg4[%c0_14, %c0_15] : memref<2x8xf32, #tpu.memory_space<vmem>>, vector<2x8xf32>
    tpu.vector_store %arg4[%c0_14, %c0_15], %32 {strides = array<i32>} : memref<2x8xf32, #tpu.memory_space<vmem>>, vector<2x8xf32>,
    return
  }
  func.func @transform_0(%arg0: i32) -> (i32, i32, i32) {
    %c0_i32 = arith.constant 0 : i32
    %c0_i32_0 = arith.constant 0 : i32
    %c0_i32_1 = arith.constant 0 : i32
    return %arg0, %c0_i32, %c0_i32_0 : i32, i32, i32
  }
  func.func @transform_1(%arg0: i32) -> (i32, i32) {
    %c0_i32 = arith.constant 0 : i32
    %c0_i32_0 = arith.constant 0 : i32
    %c0_i32_1 = arith.constant 0 : i32
    return %c0_i32, %c0_i32_0 : i32, i32
  }
  func.func @transform_2(%arg0: i32) -> (i32, i32) {
    %c0_i32 = arith.constant 0 : i32
    %c0_i32_0 = arith.constant 0 : i32
    return %arg0, %c0_i32 : i32, i32
  }
  func.func @transform_3(%arg0: i32) -> (i32, i32) {
    %c0_i32 = arith.constant 0 : i32
    %c0_i32_0 = arith.constant 0 : i32
    return %arg0, %c0_i32 : i32, i32
  }
}

</mosaic_0001>

<llo_original>
// kernel: tpu_custom_call.1
$region0: #{tpu_custom_call.1}
  #allocation0 [shape = 'u32[]', space=smem, size = 0x4, offset = 0x4, fixed_abs, tag = 'smem constant byte address 0x4 - core index']
  #allocation1 [shape = 'u32[144,128]{1,0:T(1,128)}', space=vmem, size = 0x12000, scoped, tag = 'internal scratch']
  %s0 = inlined_call_operand.hbm [shape: f32[2,8,32], index: 0, kind: input, shape index: {}]
  %s1 = inlined_call_operand.vmem [shape: f32[1,32], index: 1, kind: input, shape index: {}]
  %s2 = inlined_call_operand.hbm [shape: f32[2,32], index: 2, kind: output, shape index: {0}]
  %s3 = inlined_call_operand.hbm [shape: f32[2,8], index: 3, kind: output, shape index: {1}]
  %4 = xla_tuple %s2, %s3
  %s5 = sld [smem:[#allocation0]]
  $region30: #{tpu_custom_call.1} parent=0
    _
  %s7 = ssub.s32 1, %s5
  %s8 = scalar_select 0, %s7, %s5
  $region1: #{tpu_custom_call.1} parent=0
    #allocation2 [shape = 'u8[8192]{0}', space=vmem, size = 0x2000, scoped, tag = 'input window, operand 0, single buffered']
    #allocation3 [shape = 's32[1]{0}', space=sflag, size = 0x4, scoped, tag = 'scoped memory for tpu_custom_call.1']
    #allocation4 [shape = 's32[1]{0}', space=sflag, size = 0x4, scoped, tag = 'scoped memory for tpu_custom_call.1']
    #allocation5 [shape = 'u8[1024]{0}', space=vmem, size = 0x400, scoped, tag = 'output window, operand 0, single buffered']
    #allocation6 [shape = 'u8[1024]{0}', space=vmem, size = 0x400, scoped, tag = 'output window, operand 1, single buffered']
    #allocation7 [shape = 's32[1]{0}', space=sflag, size = 0x4, scoped, tag = 'scoped memory for tpu_custom_call.1']
    %9 = vsyncpa [#allocation3], 0
    %10 = vsyncpa [#allocation4], 0
    %11 = vsyncpa [#allocation7], 0
    // Predicated region
    $region2: #{tpu_custom_call.1} parent=1 // pred_check
      _
    $region3: #{tpu_custom_call.1} parent=1 // pred_check_branch
      %13 = sbr.rel (0) target = $region5
    $region4: #{tpu_custom_call.1} parent=1 // pred_region
      %s15 = ssub.s32 256, 256
      %16 = vsyncadd [#allocation3], %s15
      %s17 = sshll.u32 [#allocation2], 4
      %s18 = int_to_ptr.vmem [resolvable:$true] %s17
      %23 = dma.hbm_to_vmem [thread:$0]  %s0, 256, %s18, [#allocation3], 128, 128, 8
    $region5: #{tpu_custom_call.1} parent=1 // pred_fallthru
      _
    // Predicated region
    $region6: #{tpu_custom_call.1} parent=1 // pred_check
      _
    $region7: #{tpu_custom_call.1} parent=1 // pred_check_branch
      %25 = sbr.rel (0) target = $region9
    $region8: #{tpu_custom_call.1} parent=1 // pred_region
      _
    $region9: #{tpu_custom_call.1} parent=1 // pred_fallthru
      _
    // Predicated region
    $region10: #{tpu_custom_call.1} parent=1 // pred_check
      _
    $region11: #{tpu_custom_call.1} parent=1 // pred_check_branch
      %27 = sbr.rel (0) target = $region13
    $region12: #{tpu_custom_call.1} parent=1 // pred_region
      %28 = dma.done [#allocation3], 256
    $region13: #{tpu_custom_call.1} parent=1 // pred_fallthru
      _
    %v29 = vld [vmem:[#allocation2] sm:$0xff]
    %v30 = vld [vmem:[#allocation2 + $0x8] sm:$0xff]
    %v31 = vld [vmem:[%s1] sm:$0x1]
    %v33 = vlaneseq
    %v34 = vshrl.u32 %v33, 7
    %v35 = vsub.s32 0, %v34
    %v36 = vrot.slane %v31, %v35
    %v38 = vmul.f32 %v29, %v36
    %v39 = vmul.f32 %v30, %v36
    %vm40 = vcmask 261120
    %v41 = vsel %vm40, %v38, 0.0
    %42 = vadd.xlane.f32.xlu0 %v41
    %v43 = vpop.xlane.xlu0 %42
    %v44 = vsel %vm40, %v39, 0.0
    %45 = vadd.xlane.f32.xlu0 %v44
    %v46 = vpop.xlane.xlu0 %45
    %v47 = vmul.f32 %v43, 0.5
    %v48 = vmul.f32 %v46, 0.5
    %v49 = vmul.f32 %v43, %v43
    %v50 = vmul.f32 %v46, %v46
    %v51 = vmul.f32 %v43, %v49
    %v52 = vmul.f32 %v46, %v50
    %v53 = vmul.f32 %v51, 0.044715
    %v54 = vmul.f32 %v52, 0.044715
    %v55 = vadd.f32 %v43, %v53
    %v56 = vadd.f32 %v46, %v54
    %v57 = vmul.f32 %v55, 0.7978846
    %v58 = vmul.f32 %v56, 0.7978846
    %v59 = vtanh.pop %v57
    %v60 = vtanh.pop %v58
    %v61 = vadd.f32 %v59, 1.0
    %v62 = vadd.f32 %v60, 1.0
    %v63 = vmul.f32 %v47, %v61
    %v64 = vmul.f32 %v48, %v62
    %v67 = vlaneseq
    %v68 = vand.u32 %v67, 127
    %v69 = vlaneseq
    %v70 = vshrl.u32 %v69, 7
    %v71 = vsub.s32 %v68, %v70
    %v72 = vrot.slane %v63, %v71
    %v73 = vlaneseq
    %v74 = vshrl.u32 %v73, 7
    %v75 = vsub.s32 %v68, %v74
    %v76 = vrot.slane %v64, %v75
    %vm77 = vcmask 1041409
    %v78 = vsel %vm77, %v76, %v72
    %vm80 = vcmask 58368
    %v81 = vsel %vm80, %v78, -inf
    %82 = vmax.xlane.f32.xlu0 %v81
    %v83 = vpop.xlane.xlu0 %82
    %v85 = vlaneseq
    %v86 = vshrl.u32 %v85, 7
    %v87 = vsub.s32 0, %v86
    %v88 = vrot.slane %v83, %v87
    %v89 = vlaneseq
    %v90 = vshrl.u32 %v89, 7
    %v91 = vsub.s32 1, %v90
    %v92 = vrot.slane %v83, %v91
    %v95 = vsub.f32 %v63, %v88
    %v96 = vsub.f32 %v64, %v92
    %v97 = vmul.f32 %v95, 1.442695
    %v98 = vpow.pop %v97
    %v99 = vmul.f32 %v96, 1.442695
    %v100 = vpow.pop %v99
    %103 = vset.pattern.permute.xlu0 0
    %104 = vperm.xlu0 %103, %v98
    %v105 = vpop.permute.xlu0 %104
    %106 = vset.pattern.permute.xlu0 0
    %107 = vperm.xlu0 %106, %v100
    %v108 = vpop.permute.xlu0 %107
    %v109 = vlaneseq
    %v110 = vshrl.u32 %v109, 7
    %v111 = vsub.s32 %v68, %v110
    %v112 = vrot.slane %v105, %v111
    %v113 = vlaneseq
    %v114 = vshrl.u32 %v113, 7
    %v115 = vsub.s32 %v68, %v114
    %v116 = vrot.slane %v108, %v115
    %v117 = vsel %vm77, %v116, %v112
    %v119 = vsel %vm80, %v117, 0.0
    %120 = vadd.xlane.f32.xlu0 %v119
    %v121 = vpop.xlane.xlu0 %120
    %v122 = vrcp.pop %v121
    %v123 = vmul.f32 %v121, %v122
    %v124 = vsub.f32 2.0, %v123
    %v125 = vmul.f32 %v122, %v124
    %v127 = vlaneseq
    %v128 = vshrl.u32 %v127, 7
    %v129 = vsub.s32 0, %v128
    %v130 = vrot.slane %v125, %v129
    %v131 = vlaneseq
    %v132 = vshrl.u32 %v131, 7
    %v133 = vsub.s32 1, %v132
    %v134 = vrot.slane %v125, %v133
    %v137 = vmul.f32 %v98, %v130
    %v138 = vmul.f32 %v100, %v134
    %140 = vset.pattern.permute.xlu0 0
    %141 = vperm.xlu0 %140, %v137
    %v142 = vpop.permute.xlu0 %141
    %145 = vset.pattern.permute.xlu0 0
    %146 = vperm.xlu0 %145, %v138
    %v147 = vpop.permute.xlu0 %146
    %v149 = vmul.f32 %v29, %v142
    %v150 = vmul.f32 %v30, %v147
    %v151 = vsel %vm40, %v149, 0.0
    %v152 = vrot.slane %v151, 4
    %v153 = vadd.f32 %v151, %v152
    %v154 = vrot.slane %v153, 2
    %v155 = vadd.f32 %v153, %v154
    %v156 = vrot.slane %v155, 1
    %v157 = vadd.f32 %v155, %v156
    %v158 = vsel %vm40, %v150, 0.0
    %v159 = vrot.slane %v158, 4
    %v160 = vadd.f32 %v158, %v159
    %v161 = vrot.slane %v160, 2
    %v162 = vadd.f32 %v160, %v161
    %v163 = vrot.slane %v162, 1
    %v164 = vadd.f32 %v162, %v163
    %v167 = vsel %vm77, %v164, %v157
    %vm169 = vcmask 254976
    %170 = vst.msk [vmem:[#allocation5] sm:$0x3] %vm169, %v167
    %v171 = vlaneseq
    %v172 = vshrl.u32 %v171, 7
    %v173 = vsub.s32 %v68, %v172
    %v174 = vrot.slane %v142, %v173
    %v175 = vlaneseq
    %v176 = vshrl.u32 %v175, 7
    %v177 = vsub.s32 %v68, %v176
    %v178 = vrot.slane %v147, %v177
    %v179 = vsel %vm77, %v178, %v174
    %181 = vst.msk [vmem:[#allocation6] sm:$0x3] %vm80, %v179
    // Predicated region
    $region14: #{tpu_custom_call.1} parent=1 // pred_check
      _
    $region15: #{tpu_custom_call.1} parent=1 // pred_check_branch
      %183 = sbr.rel (0) target = $region17
    $region16: #{tpu_custom_call.1} parent=1 // pred_region
      %s185 = ssub.s32 32, 32
      %186 = vsyncadd [#allocation4], %s185
      %s188 = sshll.u32 [#allocation5], 4
      %s189 = int_to_ptr.vmem [resolvable:$true] %s188
      %191 = dma.vmem_to_hbm [thread:$0]  %s189, 32, %s2, [#allocation4]
    $region17: #{tpu_custom_call.1} parent=1 // pred_fallthru
      _
    // Predicated region
    $region18: #{tpu_custom_call.1} parent=1 // pred_check
      _
    $region19: #{tpu_custom_call.1} parent=1 // pred_check_branch
      %193 = sbr.rel (0) target = $region21
    $region20: #{tpu_custom_call.1} parent=1 // pred_region
      %s195 = ssub.s32 32, 32
      %196 = vsyncadd [#allocation7], %s195
      %s198 = sshll.u32 [#allocation6], 4
      %s199 = int_to_ptr.vmem [resolvable:$true] %s198
      %201 = dma.vmem_to_hbm [thread:$0]  %s199, 32, %s3, [#allocation7]
    $region21: #{tpu_custom_call.1} parent=1 // pred_fallthru
      _
    // Predicated region
    $region22: #{tpu_custom_call.1} parent=1 // pred_check
      _
    $region23: #{tpu_custom_call.1} parent=1 // pred_check_branch
      %203 = sbr.rel (0) target = $region25
    $region24: #{tpu_custom_call.1} parent=1 // pred_region
      %204 = dma.done [#allocation4], 32
    $region25: #{tpu_custom_call.1} parent=1 // pred_fallthru
      _
    // Predicated region
    $region26: #{tpu_custom_call.1} parent=1 // pred_check
      _
    $region27: #{tpu_custom_call.1} parent=1 // pred_check_branch
      %206 = sbr.rel (0) target = $region29
    $region28: #{tpu_custom_call.1} parent=1 // pred_region
      %207 = dma.done [#allocation7], 32
    $region29: #{tpu_custom_call.1} parent=1 // pred_fallthru
      _
    %208 = vsyncpa [#allocation3], 1
    %209 = vsyncpa [#allocation4], 1
    %210 = vsyncpa [#allocation7], 1

</llo_original>
